<compile_context>
chip_gen: v7x
topology: tpu7x:2x2x1
jax: 0.10.0
libtpu: 0.0.40
codegen_flags: <defaults>
</compile_context>

<pallas_src>
import functools
import math

import jax
import jax.numpy as jnp
from jax.experimental import pallas as pl
from jax.experimental.pallas import tpu as pltpu


# ----------------------------------------------------------------------------
# Helpers
# ----------------------------------------------------------------------------
_CAST_LANES = 1024          # multiple of 128 -> unmasked, lane-dense stores
_SN_EPS = 1e-6


def _round_up(x, m):
    return ((x + m - 1) // m) * m


def _sublane_multiple(itemsize):
    # sub-32-bit dtypes pack along sublanes: bf16 vreg is [16,128], int8 [32,128]
    return {1: 32, 2: 16}.get(int(itemsize), 8)


@functools.lru_cache(maxsize=1)
def _vmem_limit_bytes():
    """Per-generation VMEM limit: ~3/4 of physical, capped at ~100 MiB."""
    cap = 64 * 1024 * 1024  # conservative default: v7x per-TensorCore VMEM
    try:
        info = pltpu.get_tpu_info()
        c = int(getattr(info, "vmem_capacity_bytes", 0) or 0)
        if c > 0:
            cap = c
    except Exception:
        pass
    return max(16 * 1024 * 1024, min(int(cap * 3 // 4), 100 * 1024 * 1024))


# ----------------------------------------------------------------------------
# Pallas kernels
# ----------------------------------------------------------------------------
def _format_cast_kernel(x_ref, o_ref):
    # format_input_data default path: cast to float32 (the HBM->VMEM DMA done
    # by pallas_call plays the role of the device transfer).
    o_ref[...] = x_ref[...].astype(jnp.float32)


def _sn_fused_kernel(x_ref, o_ref, *, eps):
    # Per-sample standardization when the whole feature row fits in VMEM.
    # Two-pass variance (mean, then centered sum-of-squares) for stability.
    # TODO(synk): vschaos `utils.sample_normalize` source unavailable here;
    # implemented as per-sample standardization (zero mean / unit variance).
    x = x_ref[...].astype(jnp.float32)
    inv_n = 1.0 / float(x.shape[-1])
    mean = jnp.sum(x, axis=-1, keepdims=True) * inv_n
    xc = x - mean
    var = jnp.sum(xc * xc, axis=-1, keepdims=True) * inv_n
    o_ref[...] = xc * jax.lax.rsqrt(var + eps)


def _sn_stats_kernel(x_ref, mean_ref, istd_ref, mean_acc, m2_acc, *, total_f, eps):
    # Large-F path, pass 1: per-row mean / inv-std via a feature-axis reduction
    # grid.  Tiles are merged with Chan's parallel-variance update (numerically
    # stable); the ragged last feature tile is masked.
    f = pl.program_id(1)
    nf = pl.num_programs(1)
    x = x_ref[...].astype(jnp.float32)
    rows, fb = x.shape

    start = f * fb
    valid = jnp.minimum(fb, total_f - start)            # elems in this tile
    col = jax.lax.broadcasted_iota(jnp.int32, (rows, fb), 1)
    mask = col < valid
    cnt = valid.astype(jnp.float32)

    xm = jnp.where(mask, x, 0.0)
    tile_sum = jnp.sum(xm, axis=-1, keepdims=True)
    tile_mean = tile_sum / cnt
    xc = jnp.where(mask, x - tile_mean, 0.0)
    tile_m2 = jnp.sum(xc * xc, axis=-1, keepdims=True)

    @pl.when(f == 0)
    def _():
        mean_acc[...] = tile_mean
        m2_acc[...] = tile_m2

    @pl.when(f > 0)
    def _():
        n_prev = (f * fb).astype(jnp.float32)            # only last tile ragged
        n_new = n_prev + cnt
        delta = tile_mean - mean_acc[...]
        mean_acc[...] = mean_acc[...] + delta * (cnt / n_new)
        m2_acc[...] = m2_acc[...] + tile_m2 + (delta * delta) * (n_prev * cnt / n_new)

    @pl.when(f == nf - 1)
    def _():
        var = m2_acc[...] / jnp.float32(total_f)
        mean_ref[...] = mean_acc[...]
        istd_ref[...] = jax.lax.rsqrt(var + eps)


def _sn_apply_kernel(x_ref, mean_ref, istd_ref, o_ref):
    # Large-F path, pass 2: elementwise normalize with precomputed stats.
    x = x_ref[...].astype(jnp.float32)
    o_ref[...] = (x - mean_ref[...]) * istd_ref[...]


# ----------------------------------------------------------------------------
# Wrappers
# ----------------------------------------------------------------------------
def _run_cast_kernel(x):
    """Elementwise float32 cast on a lane/sublane-dense slab (order-free)."""
    orig_shape = x.shape
    total = int(math.prod(orig_shape)) if orig_shape else 1
    if total == 0:
        return jnp.zeros(orig_shape, jnp.float32)

    flat = x.reshape(-1)
    pad = (-total) % _CAST_LANES
    if pad:  # only pad when the flat size is not already a multiple of 1024
        flat = jnp.pad(flat, (0, pad))
    n_rows = (total + pad) // _CAST_LANES
    slab = flat.reshape(n_rows, _CAST_LANES)

    in_bytes = jnp.dtype(x.dtype).itemsize
    sub = _sublane_multiple(in_bytes)
    vmem_limit = _vmem_limit_bytes()

    # double-buffered input + f32 output block must fit in ~half the limit
    max_rows = (vmem_limit // 2) // (_CAST_LANES * (in_bytes + 4) * 2)
    max_rows = max(sub, (max_rows // sub) * sub)
    max_rows = min(max_rows, 2048)
    # keep >= 2 grid steps when possible so both v7x TensorCores get work
    row_block = min(max_rows, _round_up(pl.cdiv(n_rows, 2), sub))
    if row_block >= n_rows:
        row_block = n_rows            # full-extent block (always layout-legal)
    grid = pl.cdiv(n_rows, row_block)

    out = pl.pallas_call(
        _format_cast_kernel,
        out_shape=jax.ShapeDtypeStruct((n_rows, _CAST_LANES), jnp.float32),
        grid_spec=pltpu.PrefetchScalarGridSpec(
            num_scalar_prefetch=0,
            grid=(grid,),
            in_specs=[pl.BlockSpec((row_block, _CAST_LANES), lambda i: (i, 0))],
            out_specs=pl.BlockSpec((row_block, _CAST_LANES), lambda i: (i, 0)),
        ),
        compiler_params=pltpu.CompilerParams(
            dimension_semantics=("parallel",),
            vmem_limit_bytes=vmem_limit,
        ),
    )(slab)

    out_flat = out.reshape(-1)
    if pad:
        out_flat = out_flat[:total]
    return out_flat.reshape(orig_shape)


def _run_samplenorm_fused(x_flat, row_block, vmem_limit):
    """Single-pass per-sample standardization; whole feature row in VMEM."""
    B, F = x_flat.shape
    return pl.pallas_call(
        functools.partial(_sn_fused_kernel, eps=_SN_EPS),
        out_shape=jax.ShapeDtypeStruct((B, F), jnp.float32),
        grid_spec=pltpu.PrefetchScalarGridSpec(
            num_scalar_prefetch=0,
            grid=(pl.cdiv(B, row_block),),
            in_specs=[pl.BlockSpec((row_block, F), lambda b: (b, 0))],
            out_specs=pl.BlockSpec((row_block, F), lambda b: (b, 0)),
        ),
        compiler_params=pltpu.CompilerParams(
            dimension_semantics=("parallel",),
            vmem_limit_bytes=vmem_limit,
        ),
    )(x_flat)


def _run_samplenorm_two_phase(x_flat, row_block, f_block, vmem_limit=None):
    """Large-F path: feature-axis reduction for stats, then normalize pass."""
    B, F = x_flat.shape
    if vmem_limit is None:
        vmem_limit = _vmem_limit_bytes()
    row_block = min(row_block, B)
    if f_block >= F:
        f_block = F
    b_grid = pl.cdiv(B, row_block)
    f_grid = pl.cdiv(F, f_block)

    mean, istd = pl.pallas_call(
        functools.partial(_sn_stats_kernel, total_f=F, eps=_SN_EPS),
        out_shape=(jax.ShapeDtypeStruct((B, 1), jnp.float32),
                   jax.ShapeDtypeStruct((B, 1), jnp.float32)),
        grid_spec=pltpu.PrefetchScalarGridSpec(
            num_scalar_prefetch=0,
            grid=(b_grid, f_grid),
            in_specs=[pl.BlockSpec((row_block, f_block), lambda b, f: (b, f))],
            out_specs=[pl.BlockSpec((row_block, 1), lambda b, f: (b, 0)),
                       pl.BlockSpec((row_block, 1), lambda b, f: (b, 0))],
            scratch_shapes=[pltpu.VMEM((row_block, 1), jnp.float32),
                            pltpu.VMEM((row_block, 1), jnp.float32)],
        ),
        compiler_params=pltpu.CompilerParams(
            dimension_semantics=("parallel", "arbitrary"),
            vmem_limit_bytes=vmem_limit,
        ),
    )(x_flat)

    return pl.pallas_call(
        _sn_apply_kernel,
        out_shape=jax.ShapeDtypeStruct((B, F), jnp.float32),
        grid_spec=pltpu.PrefetchScalarGridSpec(
            num_scalar_prefetch=0,
            grid=(b_grid, f_grid),
            in_specs=[pl.BlockSpec((row_block, f_block), lambda b, f: (b, f)),
                      pl.BlockSpec((row_block, 1), lambda b, f: (b, 0)),
                      pl.BlockSpec((row_block, 1), lambda b, f: (b, 0))],
            out_specs=pl.BlockSpec((row_block, f_block), lambda b, f: (b, f)),
        ),
        compiler_params=pltpu.CompilerParams(
            dimension_semantics=("parallel", "parallel"),
            vmem_limit_bytes=vmem_limit,
        ),
    )(x_flat, mean, istd)


def _run_samplenorm_kernel(x_flat, max_block_bytes=None):
    """Per-sample standardization over flattened features."""
    B, F = x_flat.shape
    in_bytes = jnp.dtype(x_flat.dtype).itemsize
    sub = _sublane_multiple(in_bytes)
    vmem_limit = _vmem_limit_bytes()
    budget = max_block_bytes if max_block_bytes is not None else vmem_limit // 2

    # Fused path: double-buffered in/out blocks + in-kernel f32 copy & temps.
    fused_bytes_per_row = F * (2 * in_bytes + 2 * 4 + 3 * 4)
    min_rows = B if B < sub else sub
    if fused_bytes_per_row * min_rows <= budget:
        row_block = max(min_rows, (budget // fused_bytes_per_row) // sub * sub)
        if B > sub:
            # keep >= 2 grid steps when possible (v7x has 2 TensorCores)
            row_block = min(row_block, _round_up(pl.cdiv(B, 2), sub))
        row_block = min(row_block, 1024)
        if row_block >= B:
            row_block = B
        return _run_samplenorm_fused(x_flat, row_block, vmem_limit)

    # Large-F path: bounded feature tiles, two pallas_calls.
    row_block = min(_round_up(B, sub), 256)
    if row_block >= B:
        row_block = B
    per_feat_col_bytes = row_block * (2 * in_bytes + 2 * 4 + 3 * 4)
    f_block = (budget // max(per_feat_col_bytes, 1)) // 128 * 128
    f_block = int(max(128, min(f_block, 8192)))
    return _run_samplenorm_two_phase(x_flat, row_block, f_block, vmem_limit)


# ----------------------------------------------------------------------------
# JAX-side port of AbstractVAE (abstract base class -> no learnable params)
# ----------------------------------------------------------------------------
def disentangle_hidden_params(hidden_params):
    def dis_tool(single_param):
        enc = single_param.get('encoder', single_param)
        dec = single_param.get('decoder', single_param)
        enc = dict(enc) if isinstance(enc, dict) else [dict(k) for k in enc]
        dec = dict(dec) if isinstance(dec, dict) else [dict(k) for k in dec]
        if isinstance(enc, dict):
            enc.pop('decoder', None)
        if isinstance(dec, dict) and 'encoder' in dec:
            dec.pop('decoder', None)
        return enc, dec

    enc_hp = [None] * len(hidden_params)
    dec_hp = [None] * len(hidden_params)
    for i, layer in enumerate(hidden_params):
        if layer is None:
            continue
        if isinstance(layer, list):
            cur = [dis_tool(x) for x in layer]
            enc_hp[i], dec_hp[i] = [c[0] for c in cur], [c[1] for c in cur]
        else:
            enc_hp[i], dec_hp[i] = dis_tool(layer)
    return enc_hp, dec_hp


class AbstractVAEPallas:
    take_sequences = False

    def __init__(self, input_params, latent_params,
                 hidden_params=[{'dim': 800, 'layers': 2}], device=-1, **kwargs):
        if not isinstance(latent_params, list):
            latent_params = [latent_params]
        if not isinstance(hidden_params, list):
            hidden_params = [hidden_params]
        self.pinput = input_params
        self.phidden = list(hidden_params)
        self.platent = latent_params
        while len(self.phidden) < len(self.platent):
            self.phidden.append(self.phidden[-1])
        # make_encoders / make_decoders return empty module lists in the
        # abstract class -> no parameters to initialize.
        _enc_hp, _dec_hp = disentangle_hidden_params(self.phidden)
        self.encoders = []   # nn.ModuleList() equivalent
        self.decoders = []   # nn.ModuleList() equivalent
        self.sample_norm = kwargs.get('sample_norm', False)
        # TODO(synk): optimizer/scheduler/save/load/manifold machinery of the
        # original class is host-side bookkeeping with no Pallas equivalent.

    def __len__(self):
        return len(self.platent)

    # ---- the only real tensor op of the class, run as Pallas kernels ----
    def format_input_data(self, x, sample_norm=False):
        if x is None:
            return None
        if isinstance(x, (list, tuple)):
            return [self.format_input_data(xi, sample_norm=sample_norm) for xi in x]
        sample_norm = sample_norm or self.sample_norm
        x = jnp.asarray(x)
        if sample_norm:
            B = x.shape[0]
            out = _run_samplenorm_kernel(x.reshape(B, -1))
            return out.reshape(x.shape)
        return _run_cast_kernel(x)

    # ---- abstract-class semantics preserved exactly ----
    def encode(self, x, options={}, *args, **kwargs):
        return None

    def decode(self, z, options={}, *args, **kwargs):
        return None

    def forward(self, x, y=None, options={}, *args, **kwargs):
        return {}

    def get_loss(self, *args):
        return 0.0


# ----------------------------------------------------------------------------
if __name__ == "__main__":
    key = jax.random.PRNGKey(0)
    # small NCHW input consistent with an image-style VAE input
    x = jax.random.normal(key, (2, 4, 16, 16), dtype=jnp.bfloat16)

    input_params = {'dim': 4 * 16 * 16, 'dist': 'normal'}
    latent_params = {'dim': 32, 'dist': 'normal'}
    vae = AbstractVAEPallas(input_params, latent_params,
                            hidden_params=[{'dim': 800, 'layers': 2}])

    # kernelized data-formatting path (cast to float32)
    x_fmt = jax.block_until_ready(vae.format_input_data(x))
    ref = jnp.asarray(x, dtype=jnp.float32)
    assert x_fmt.shape == (2, 4, 16, 16) and x_fmt.dtype == jnp.float32
    assert jnp.array_equal(x_fmt, ref)

    # cast path with a flat size that is NOT a multiple of 1024 (boundary pad)
    xc = jax.random.normal(jax.random.PRNGKey(2), (3, 5, 7), dtype=jnp.float32)
    yc = jax.block_until_ready(_run_cast_kernel(xc))
    assert yc.shape == xc.shape and jnp.array_equal(yc, xc)

    # kernelized sample_norm path (fused, whole row in VMEM)
    x_norm = jax.block_until_ready(vae.format_input_data(x, sample_norm=True))
    assert x_norm.shape == x.shape and x_norm.dtype == jnp.float32
    xf = ref.reshape(2, -1)
    mean = xf.mean(axis=-1, keepdims=True)
    var = ((xf - mean) ** 2).mean(axis=-1, keepdims=True)
    ref_norm = ((xf - mean) * jax.lax.rsqrt(var + 1e-6)).reshape(x.shape)
    assert jnp.allclose(x_norm, ref_norm, atol=1e-3, rtol=1e-3)
    assert bool(jnp.isfinite(x_norm).all())

    # large-F two-phase path: feature-axis reduction grid with ragged batch
    # (B=10, row_block=8) and ragged feature tile (F=1000, f_block=256)
    xb = jax.random.normal(jax.random.PRNGKey(1), (10, 1000), jnp.float32) * 3.0 + 5.0
    yb = jax.block_until_ready(_run_samplenorm_two_phase(xb, row_block=8, f_block=256))
    mb = xb.mean(axis=-1, keepdims=True)
    vb = ((xb - mb) ** 2).mean(axis=-1, keepdims=True)
    yb_ref = (xb - mb) * jax.lax.rsqrt(vb + 1e-6)
    assert yb.shape == (10, 1000) and jnp.allclose(yb, yb_ref, atol=1e-3, rtol=1e-3)

    # abstract forward semantics: returns {}
    out = vae.forward(x_fmt)
    assert out == {}
    assert vae.encode(x_fmt) is None and vae.decode(None) is None
    assert len(vae) == 1 and vae.get_loss() == 0.0

    print("KERNEL_OK")
</pallas_src>

<mosaic_0001>
module attributes {stable_mosaic.version = 11 : i64} {
  func.func @_format_cast_kernel(%arg0: i32, %arg1: memref<2x1024xbf16, #tpu.memory_space<vmem>>, %arg2: memref<2x1024xf32, #tpu.memory_space<vmem>>) attributes {dimension_semantics = [#tpu.dimension_semantics<parallel>], iteration_bounds = array<i64: 1>, scalar_prefetch = 0 : i64, scratch_operands = 0 : i64, tpu.core_type = #tpu.core_type<tc>, window_params = [{transform_indices = @transform_0, window_bounds = array<i64: 2, 1024>}, {transform_indices = @transform_1, window_bounds = array<i64: 2, 1024>}]} {
    %c0 = arith.constant 0 : index
    %c0_0 = arith.constant 0 : index
    %0 = vector.load %arg1[%c0, %c0_0] : memref<2x1024xbf16, #tpu.memory_space<vmem>>, vector<2x1024xbf16>
    %1 = arith.extf %0 : vector<2x1024xbf16> to vector<2x1024xf32>
    %c0_1 = arith.constant 0 : index
    %c0_2 = arith.constant 0 : index
    %2 = vector.load %arg2[%c0_1, %c0_2] : memref<2x1024xf32, #tpu.memory_space<vmem>>, vector<2x1024xf32>
    tpu.vector_store %arg2[%c0_1, %c0_2], %1 {strides = array<i32>} : memref<2x1024xf32, #tpu.memory_space<vmem>>, vector<2x1024xf32>,
    return
  }
  func.func @transform_0(%arg0: i32) -> (i32, i32) {
    %c0_i32 = arith.constant 0 : i32
    %c0_i32_0 = arith.constant 0 : i32
    return %arg0, %c0_i32 : i32, i32
  }
  func.func @transform_1(%arg0: i32) -> (i32, i32) {
    %c0_i32 = arith.constant 0 : i32
    %c0_i32_0 = arith.constant 0 : i32
    return %arg0, %c0_i32 : i32, i32
  }
}

</mosaic_0001>

<llo_original>
// kernel: tpu_custom_call.1
$region0: #{tpu_custom_call.1}
  #allocation0 [shape = 'u32[]', space=smem, size = 0x4, offset = 0x4, fixed_abs, tag = 'smem constant byte address 0x4 - core index']
  #allocation1 [shape = 'u32[144,128]{1,0:T(1,128)}', space=vmem, size = 0x12000, scoped, tag = 'internal scratch']
  %s0 = inlined_call_operand.hbm [shape: bf16[2,1024], index: 0, kind: input, shape index: {}]
  %s1 = inlined_call_operand.hbm [shape: f32[2,1024], index: 1, kind: output, shape index: {}]
  %s2 = sld [smem:[#allocation0]]
  $region18: #{tpu_custom_call.1} parent=0
    _
  %s4 = ssub.s32 1, %s2
  %s5 = scalar_select 0, %s4, %s2
  $region1: #{tpu_custom_call.1} parent=0
    #allocation2 [shape = 'u8[4096]{0}', space=vmem, size = 0x1000, scoped, tag = 'input window, operand 0, single buffered']
    #allocation3 [shape = 's32[1]{0}', space=sflag, size = 0x4, scoped, tag = 'scoped memory for tpu_custom_call.1']
    #allocation4 [shape = 's32[1]{0}', space=sflag, size = 0x4, scoped, tag = 'scoped memory for tpu_custom_call.1']
    #allocation5 [shape = 'u8[8192]{0}', space=vmem, size = 0x2000, scoped, tag = 'output window, operand 0, single buffered']
    %6 = vsyncpa [#allocation3], 0
    %7 = vsyncpa [#allocation4], 0
    // Predicated region
    $region2: #{tpu_custom_call.1} parent=1 // pred_check
      _
    $region3: #{tpu_custom_call.1} parent=1 // pred_check_branch
      %9 = sbr.rel (0) target = $region5
    $region4: #{tpu_custom_call.1} parent=1 // pred_region
      %s11 = ssub.s32 128, 128
      %12 = vsyncadd [#allocation3], %s11
      %s14 = sshll.u32 [#allocation2], 4
      %s15 = int_to_ptr.vmem [resolvable:$true] %s14
      %17 = dma.hbm_to_vmem [thread:$0]  %s0, 128, %s15, [#allocation3]
    $region5: #{tpu_custom_call.1} parent=1 // pred_fallthru
      _
    // Predicated region
    $region6: #{tpu_custom_call.1} parent=1 // pred_check
      _
    $region7: #{tpu_custom_call.1} parent=1 // pred_check_branch
      %19 = sbr.rel (0) target = $region9
    $region8: #{tpu_custom_call.1} parent=1 // pred_region
      %20 = dma.done [#allocation3], 128
    $region9: #{tpu_custom_call.1} parent=1 // pred_fallthru
      _
    %v21 = vld [vmem:[#allocation2] sm:$0xff]
    %v22 = vunpack.c.l.bf16 %v21
    %v23 = vunpack.c.h.bf16 %v21
    %24 = vst [vmem:[#allocation5] sm:$0xff] %v22
    %25 = vst [vmem:[#allocation5 + $0x8] sm:$0xff] %v23
    // Predicated region
    $region10: #{tpu_custom_call.1} parent=1 // pred_check
      _
    $region11: #{tpu_custom_call.1} parent=1 // pred_check_branch
      %27 = sbr.rel (0) target = $region13
    $region12: #{tpu_custom_call.1} parent=1 // pred_region
      %s29 = ssub.s32 256, 256
      %30 = vsyncadd [#allocation4], %s29
      %s32 = sshll.u32 [#allocation5], 4
      %s33 = int_to_ptr.vmem [resolvable:$true] %s32
      %35 = dma.vmem_to_hbm [thread:$0]  %s33, 256, %s1, [#allocation4]
    $region13: #{tpu_custom_call.1} parent=1 // pred_fallthru
      _
    // Predicated region
    $region14: #{tpu_custom_call.1} parent=1 // pred_check
      _
    $region15: #{tpu_custom_call.1} parent=1 // pred_check_branch
      %37 = sbr.rel (0) target = $region17
    $region16: #{tpu_custom_call.1} parent=1 // pred_region
      %38 = dma.done [#allocation4], 256
    $region17: #{tpu_custom_call.1} parent=1 // pred_fallthru
      _
    %39 = vsyncpa [#allocation3], 1
    %40 = vsyncpa [#allocation4], 1

</llo_original>
